<compile_context>
chip_gen: v7x
topology: tpu7x:2x2x1
jax: 0.10.0
libtpu: 0.0.40
codegen_flags: <defaults>
</compile_context>

<pallas_src>
import jax
import jax.numpy as jnp
from jax.experimental import pallas as pl
from jax.experimental.pallas import tpu as pltpu


LANE = 128     # lane width: N dims (hidden/output) padded to a multiple of this
SUBLANE = 8    # f32 sublane packing for the batch (second-to-last) dim


def _round_up(x, m):
    return ((x + m - 1) // m) * m


def _cdiv(a, b):
    return -(-a // b)


def mlp_kernel(x_ref, w1_ref, b1_ref, w2_ref, b2_ref, o_ref):
    # Layer 0: Linear(input_dim -> hidden) + tanh.  K (input_dim) is unpadded;
    # N (hidden) is lane-padded, so the intermediate is lane-dense in VMEM.
    h = jnp.tanh(
        jnp.dot(x_ref[...], w1_ref[...], preferred_element_type=jnp.float32)
        + b1_ref[...]
    )
    # Layer 1: Linear(hidden -> output), no final activation; lane-dense store.
    # NOTE: if the single EUP (tanh) ever shows on the critical path for much
    # larger hidden dims, split `h` into hidden-dim chunks so tanh(chunk k)
    # overlaps matmul(chunk k+1) and accumulate the second matmul per chunk.
    o_ref[...] = (
        jnp.dot(h, w2_ref[...], preferred_element_type=jnp.float32) + b2_ref[...]
    ).astype(o_ref.dtype)


def prepare_params(params):
    """One-time weight packing (do NOT call per forward pass).

    Pads only the N dims (hidden, output) to lane multiples; W1's K rows stay
    at input_dim to match the unpadded x. Zero padding is mathematically
    inert: padded hidden cols get zero W1 cols and zero bias -> tanh(0)=0 ->
    multiply zero W2 rows; padded output cols are sliced off in mlp_forward.
    """
    input_dim, hidden_dim = params["w1"].shape
    output_dim = params["w2"].shape[1]
    hid_p = _round_up(hidden_dim, LANE)
    out_p = _round_up(output_dim, LANE)

    w1 = jnp.zeros((input_dim, hid_p), jnp.float32).at[:, :hidden_dim].set(params["w1"])
    b1 = jnp.zeros((1, hid_p), jnp.float32).at[:, :hidden_dim].set(params["b1"])
    w2 = jnp.zeros((hid_p, out_p), jnp.float32).at[:hidden_dim, :output_dim].set(params["w2"])
    b2 = jnp.zeros((1, out_p), jnp.float32).at[:, :output_dim].set(params["b2"])
    return dict(
        w1=w1, b1=b1, w2=w2, b2=b2,
        input_dim=input_dim, hidden_dim=hidden_dim, output_dim=output_dim,
        hid_p=hid_p, out_p=out_p,
    )


def mlp_forward(x, prep, *, block_b=256):
    """MLP forward: tanh(x @ W1 + b1) @ W2 + b2.

    x: (B, input_dim) float32.  prep: output of prepare_params().
    block_b=256 is safe on all generations (v5e scoped VMEM, v7x 64 MiB); on
    v6e with huge B a larger block_b is also fine since vmem_limit_bytes is
    set explicitly below.
    """
    B, input_dim = x.shape
    assert input_dim == prep["input_dim"]
    output_dim = prep["output_dim"]
    hid_p, out_p = prep["hid_p"], prep["out_p"]
    w1, b1, w2, b2 = prep["w1"], prep["b1"], prep["w2"], prep["b2"]

    # ---- balanced batch tiling --------------------------------------------
    num_tiles = _cdiv(B, block_b)
    if num_tiles == 1 and B > 2 * SUBLANE:
        num_tiles = 2  # keep both v7x TensorCores busy when B allows it
    block_eff = _round_up(_cdiv(B, num_tiles), SUBLANE)
    B_pad = block_eff * num_tiles
    grid = (num_tiles,)

    # Only copy x when a small tail pad is actually required (< SUBLANE rows
    # per tile); the feature dim is never padded, so no K-dim HBM inflation.
    x_p = x if B_pad == B else jnp.zeros((B_pad, input_dim), x.dtype).at[:B].set(x)

    def resident_spec(arr):
        shape = arr.shape
        # Constant index map -> fetched once; single-buffer to halve VMEM use.
        return pl.BlockSpec(shape, lambda i: (0,) * len(shape),
                            pipeline_mode=pl.Buffered(1))

    in_specs = [
        pl.BlockSpec((block_eff, input_dim), lambda i: (i, 0)),  # x tile over batch
        resident_spec(w1), resident_spec(b1),
        resident_spec(w2), resident_spec(b2),
    ]
    out_specs = pl.BlockSpec((block_eff, out_p), lambda i: (i, 0))

    # ---- explicit VMEM budget for the chosen tiling ------------------------
    f32 = 4
    resident_bytes = (w1.size + b1.size + w2.size + b2.size) * f32      # Buffered(1)
    io_bytes = 2 * block_eff * (input_dim + out_p) * f32                # double-buffered x / out tiles
    tmp_bytes = block_eff * hid_p * f32                                 # hidden activation temp
    vmem_limit = int(min(max(2 * (resident_bytes + io_bytes + tmp_bytes), 4 << 20),
                         64 << 20))

    # ---- scheduler hint with true (unpadded-x) traffic ----------------------
    flops = 2 * B_pad * (input_dim * hid_p + hid_p * out_p)
    bytes_accessed = f32 * (B * input_dim + w1.size + b1.size + w2.size + b2.size
                            + B * output_dim)
    cost = pl.CostEstimate(flops=flops, transcendentals=B_pad * hid_p,
                           bytes_accessed=bytes_accessed)

    out_padded = pl.pallas_call(
        mlp_kernel,
        out_shape=jax.ShapeDtypeStruct((B_pad, out_p), x.dtype),
        grid_spec=pltpu.PrefetchScalarGridSpec(
            num_scalar_prefetch=0,
            grid=grid,
            in_specs=in_specs,
            out_specs=out_specs,
        ),
        compiler_params=pltpu.CompilerParams(
            dimension_semantics=("parallel",),
            vmem_limit_bytes=vmem_limit,
        ),
        cost_estimate=cost,
    )(x_p, w1, b1, w2, b2)

    return out_padded[:B, :output_dim]


def init_params(key, input_dim, hidden_dim, output_dim):
    """nn.Linear-style init (uniform +-1/sqrt(fan_in)); weights stored (in, out)."""
    def linear(key, fan_in, fan_out):
        kw, kb = jax.random.split(key)
        bound = 1.0 / jnp.sqrt(fan_in)
        w = jax.random.uniform(kw, (fan_in, fan_out), jnp.float32, -bound, bound)
        b = jax.random.uniform(kb, (1, fan_out), jnp.float32, -bound, bound)
        return w, b

    k1, k2 = jax.random.split(key)
    w1, b1 = linear(k1, input_dim, hidden_dim)   # Linear(input_dim, hidden_dim)
    w2, b2 = linear(k2, hidden_dim, output_dim)  # Linear(hidden_dim, output_dim)
    return dict(w1=w1, b1=b1, w2=w2, b2=b2)


def mlp_reference(x, p):
    return jnp.tanh(x @ p["w1"] + p["b1"]) @ p["w2"] + p["b2"]


if __name__ == "__main__":
    # Small shapes consistent with the module: depth=2, tanh, no final act.
    batch, input_dim, hidden_dim, output_dim = 8, 16, 32, 8

    key = jax.random.PRNGKey(0)
    k_x, k_p = jax.random.split(key)
    x = jax.random.normal(k_x, (batch, input_dim), dtype=jnp.float32)
    params = init_params(k_p, input_dim, hidden_dim, output_dim)

    prep = prepare_params(params)          # one-time pack (not per call)
    out = mlp_forward(x, prep)
    out = jax.block_until_ready(out)

    ref = mlp_reference(x, params)
    assert out.shape == (batch, output_dim)
    assert jnp.allclose(out, ref, atol=1e-5, rtol=1e-5)

    print("KERNEL_OK")
</pallas_src>

<mosaic_0001>
module attributes {stable_mosaic.version = 11 : i64} {
  func.func @mlp_kernel(%arg0: i32, %arg1: memref<8x16xf32, #tpu.memory_space<vmem>>, %arg2: memref<16x128xf32, #tpu.memory_space<vmem>>, %arg3: memref<1x128xf32, #tpu.memory_space<vmem>>, %arg4: memref<128x128xf32, #tpu.memory_space<vmem>>, %arg5: memref<1x128xf32, #tpu.memory_space<vmem>>, %arg6: memref<8x128xf32, #tpu.memory_space<vmem>>) attributes {dimension_semantics = [#tpu.dimension_semantics<parallel>], iteration_bounds = array<i64: 1>, scalar_prefetch = 0 : i64, scratch_operands = 0 : i64, tpu.core_type = #tpu.core_type<tc>, window_params = [{transform_indices = @transform_0, window_bounds = array<i64: 8, 16>}, {pipeline_mode = #tpu.pipeline_mode<synchronous>, transform_indices = @transform_1, window_bounds = array<i64: 16, 128>}, {pipeline_mode = #tpu.pipeline_mode<synchronous>, transform_indices = @transform_2, window_bounds = array<i64: 1, 128>}, {pipeline_mode = #tpu.pipeline_mode<synchronous>, transform_indices = @transform_3, window_bounds = array<i64: 128, 128>}, {pipeline_mode = #tpu.pipeline_mode<synchronous>, transform_indices = @transform_4, window_bounds = array<i64: 1, 128>}, {transform_indices = @transform_5, window_bounds = array<i64: 8, 128>}]} {
    %c0 = arith.constant 0 : index
    %c0_0 = arith.constant 0 : index
    %0 = vector.load %arg1[%c0, %c0_0] : memref<8x16xf32, #tpu.memory_space<vmem>>, vector<8x16xf32>
    %c0_1 = arith.constant 0 : index
    %c0_2 = arith.constant 0 : index
    %1 = vector.load %arg2[%c0_1, %c0_2] : memref<16x128xf32, #tpu.memory_space<vmem>>, vector<16x128xf32>
    %cst = arith.constant dense<0.000000e+00> : vector<8x128xf32>
    %2 = tpu.matmul %0, %1, %cst {dimension_numbers = #tpu.dot_dimension_numbers<[1], [0], [0], [1], [0, 0, 1, 1], [], []>} : vector<8x16xf32>, vector<16x128xf32>, vector<8x128xf32> -> vector<8x128xf32>
    %c0_3 = arith.constant 0 : index
    %c0_4 = arith.constant 0 : index
    %3 = vector.load %arg3[%c0_3, %c0_4] : memref<1x128xf32, #tpu.memory_space<vmem>>, vector<1x128xf32>
    %4 = vector.broadcast %3 : vector<1x128xf32> to vector<8x128xf32>
    %5 = arith.addf %2, %4 : vector<8x128xf32>
    %6 = math.tanh %5 : vector<8x128xf32>
    %c0_5 = arith.constant 0 : index
    %c0_6 = arith.constant 0 : index
    %7 = vector.load %arg4[%c0_5, %c0_6] : memref<128x128xf32, #tpu.memory_space<vmem>>, vector<128x128xf32>
    %cst_7 = arith.constant dense<0.000000e+00> : vector<8x128xf32>
    %8 = tpu.matmul %6, %7, %cst_7 {dimension_numbers = #tpu.dot_dimension_numbers<[1], [0], [0], [1], [0, 0, 1, 1], [], []>} : vector<8x128xf32>, vector<128x128xf32>, vector<8x128xf32> -> vector<8x128xf32>
    %c0_8 = arith.constant 0 : index
    %c0_9 = arith.constant 0 : index
    %9 = vector.load %arg5[%c0_8, %c0_9] : memref<1x128xf32, #tpu.memory_space<vmem>>, vector<1x128xf32>
    %10 = vector.broadcast %9 : vector<1x128xf32> to vector<8x128xf32>
    %11 = arith.addf %8, %10 : vector<8x128xf32>
    %c0_10 = arith.constant 0 : index
    %c0_11 = arith.constant 0 : index
    %12 = vector.load %arg6[%c0_10, %c0_11] : memref<8x128xf32, #tpu.memory_space<vmem>>, vector<8x128xf32>
    tpu.vector_store %arg6[%c0_10, %c0_11], %11 {strides = array<i32>} : memref<8x128xf32, #tpu.memory_space<vmem>>, vector<8x128xf32>,
    return
  }
  func.func @transform_0(%arg0: i32) -> (i32, i32) {
    %c0_i32 = arith.constant 0 : i32
    %c0_i32_0 = arith.constant 0 : i32
    return %arg0, %c0_i32 : i32, i32
  }
  func.func @transform_1(%arg0: i32) -> (i32, i32) {
    %c0_i32 = arith.constant 0 : i32
    %c0_i32_0 = arith.constant 0 : i32
    %c0_i32_1 = arith.constant 0 : i32
    return %c0_i32, %c0_i32_0 : i32, i32
  }
  func.func @transform_2(%arg0: i32) -> (i32, i32) {
    %c0_i32 = arith.constant 0 : i32
    %c0_i32_0 = arith.constant 0 : i32
    %c0_i32_1 = arith.constant 0 : i32
    return %c0_i32, %c0_i32_0 : i32, i32
  }
  func.func @transform_3(%arg0: i32) -> (i32, i32) {
    %c0_i32 = arith.constant 0 : i32
    %c0_i32_0 = arith.constant 0 : i32
    %c0_i32_1 = arith.constant 0 : i32
    return %c0_i32, %c0_i32_0 : i32, i32
  }
  func.func @transform_4(%arg0: i32) -> (i32, i32) {
    %c0_i32 = arith.constant 0 : i32
    %c0_i32_0 = arith.constant 0 : i32
    %c0_i32_1 = arith.constant 0 : i32
    return %c0_i32, %c0_i32_0 : i32, i32
  }
  func.func @transform_5(%arg0: i32) -> (i32, i32) {
    %c0_i32 = arith.constant 0 : i32
    %c0_i32_0 = arith.constant 0 : i32
    return %arg0, %c0_i32 : i32, i32
  }
}

</mosaic_0001>

<llo_original>
// kernel: tpu_custom_call.1
$region0: #{tpu_custom_call.1}
  #allocation0 [shape = 'u32[]', space=smem, size = 0x4, offset = 0x4, fixed_abs, tag = 'smem constant byte address 0x4 - core index']
  #allocation1 [shape = 'u32[144,128]{1,0:T(1,128)}', space=vmem, size = 0x12000, scoped, tag = 'internal scratch']
  %s0 = inlined_call_operand.hbm [shape: f32[8,16], index: 0, kind: input, shape index: {}]
  %s1 = inlined_call_operand.hbm [shape: f32[16,128], index: 1, kind: input, shape index: {}]
  %s2 = inlined_call_operand.vmem [shape: f32[1,128], index: 2, kind: input, shape index: {}]
  %s3 = inlined_call_operand.hbm [shape: f32[128,128], index: 3, kind: input, shape index: {}]
  %s4 = inlined_call_operand.vmem [shape: f32[1,128], index: 4, kind: input, shape index: {}]
  %s5 = inlined_call_operand.hbm [shape: f32[8,128], index: 5, kind: output, shape index: {}]
  %s6 = sld [smem:[#allocation0]]
  $region42: #{tpu_custom_call.1} parent=0
    _
  %s8 = ssub.s32 1, %s6
  %s9 = scalar_select 0, %s8, %s6
  $region1: #{tpu_custom_call.1} parent=0
    #allocation2 [shape = 'u8[4096]{0}', space=vmem, size = 0x1000, scoped, tag = 'input window, operand 0, single buffered']
    #allocation3 [shape = 's32[1]{0}', space=sflag, size = 0x4, scoped, tag = 'scoped memory for tpu_custom_call.1']
    #allocation4 [shape = 's32[1]{0}', space=sflag, size = 0x4, scoped, tag = 'scoped memory for tpu_custom_call.1']
    #allocation5 [shape = 'u8[8192]{0}', space=vmem, size = 0x2000, scoped, tag = 'input window, operand 1, single buffered']
    #allocation6 [shape = 's32[1]{0}', space=sflag, size = 0x4, scoped, tag = 'scoped memory for tpu_custom_call.1']
    #allocation7 [shape = 'u8[65536]{0}', space=vmem, size = 0x10000, scoped, tag = 'input window, operand 3, single buffered']
    #allocation8 [shape = 'u8[4096]{0}', space=vmem, size = 0x1000, scoped, tag = 'output window, operand 0, single buffered']
    %10 = vsyncpa [#allocation3], 0
    %11 = vsyncpa [#allocation6], 0
    %12 = vsyncpa [#allocation4], 0
    // Predicated region
    $region2: #{tpu_custom_call.1} parent=1 // pred_check
      _
    $region3: #{tpu_custom_call.1} parent=1 // pred_check_branch
      %14 = sbr.rel (0) target = $region5
    $region4: #{tpu_custom_call.1} parent=1 // pred_region
      %s16 = ssub.s32 128, 128
      %17 = vsyncadd [#allocation3], %s16
      %s19 = sshll.u32 [#allocation2], 4
      %s20 = int_to_ptr.vmem [resolvable:$true] %s19
      %22 = dma.hbm_to_vmem [thread:$0]  %s0, 128, %s20, [#allocation3]
    $region5: #{tpu_custom_call.1} parent=1 // pred_fallthru
      _
    // Predicated region
    $region6: #{tpu_custom_call.1} parent=1 // pred_check
      _
    $region7: #{tpu_custom_call.1} parent=1 // pred_check_branch
      %24 = sbr.rel (0) target = $region9
    $region8: #{tpu_custom_call.1} parent=1 // pred_region
      %s26 = ssub.s32 256, 256
      %27 = vsyncadd [#allocation6], %s26
      %s28 = sshll.u32 [#allocation5], 4
      %s29 = int_to_ptr.vmem [resolvable:$true] %s28
      %34 = dma.hbm_to_vmem [thread:$0]  %s1, 256, %s29, [#allocation6], 128, 128, 8
    $region9: #{tpu_custom_call.1} parent=1 // pred_fallthru
      _
    // Predicated region
    $region10: #{tpu_custom_call.1} parent=1 // pred_check
      _
    $region11: #{tpu_custom_call.1} parent=1 // pred_check_branch
      %36 = sbr.rel (0) target = $region13
    $region12: #{tpu_custom_call.1} parent=1 // pred_region
      _
    $region13: #{tpu_custom_call.1} parent=1 // pred_fallthru
      _
    // Predicated region
    $region14: #{tpu_custom_call.1} parent=1 // pred_check
      _
    $region15: #{tpu_custom_call.1} parent=1 // pred_check_branch
      %38 = sbr.rel (0) target = $region17
    $region16: #{tpu_custom_call.1} parent=1 // pred_region
      %s40 = ssub.s32 2048, 2048
      %41 = vsyncadd [#allocation6], %s40
      %s42 = sshll.u32 [#allocation7], 4
      %s43 = int_to_ptr.vmem [resolvable:$true] %s42
      %48 = dma.hbm_to_vmem [thread:$0]  %s3, 2048, %s43, [#allocation6], 128, 128, 8
    $region17: #{tpu_custom_call.1} parent=1 // pred_fallthru
      _
    // Predicated region
    $region18: #{tpu_custom_call.1} parent=1 // pred_check
      _
    $region19: #{tpu_custom_call.1} parent=1 // pred_check_branch
      %50 = sbr.rel (0) target = $region21
    $region20: #{tpu_custom_call.1} parent=1 // pred_region
      _
    $region21: #{tpu_custom_call.1} parent=1 // pred_fallthru
      _
    // Predicated region
    $region22: #{tpu_custom_call.1} parent=1 // pred_check
      _
    $region23: #{tpu_custom_call.1} parent=1 // pred_check_branch
      %52 = sbr.rel (0) target = $region25
    $region24: #{tpu_custom_call.1} parent=1 // pred_region
      %53 = dma.done [#allocation3], 128
    $region25: #{tpu_custom_call.1} parent=1 // pred_fallthru
      _
    // Predicated region
    $region26: #{tpu_custom_call.1} parent=1 // pred_check
      _
    $region27: #{tpu_custom_call.1} parent=1 // pred_check_branch
      %55 = sbr.rel (0) target = $region29
    $region28: #{tpu_custom_call.1} parent=1 // pred_region
      %56 = dma.done [#allocation6], 256
    $region29: #{tpu_custom_call.1} parent=1 // pred_fallthru
      _
    // Predicated region
    $region30: #{tpu_custom_call.1} parent=1 // pred_check
      _
    $region31: #{tpu_custom_call.1} parent=1 // pred_check_branch
      %58 = sbr.rel (0) target = $region33
    $region32: #{tpu_custom_call.1} parent=1 // pred_region
      %59 = dma.done [#allocation6], 2048
    $region33: #{tpu_custom_call.1} parent=1 // pred_fallthru
      _
    %v60 = vld [vmem:[#allocation2] sm:$0xff]
    %v61 = vld [vmem:[#allocation5] sm:$0xff]
    %v62 = vld [vmem:[#allocation5 + $0x8] sm:$0xff]
    %v63 = vld [vmem:[%s2] sm:$0x1]
    %v65 = vlaneseq
    %v66 = vshrl.u32 %v65, 7
    %v67 = vsub.s32 0, %v66
    %v68 = vrot.slane %v63, %v67
    %vm70 = vcmask 130048
    %v72 = vsel %vm70, %v60, 0
    %74 = vmatprep.subr.mxu0 0.0
    %75 = vmatpush1.msra.mxu0 %v61
    %76 = vmatprep.subr.mxu0 0.0
    %77 = vmatpush1.msra.mxu0 %v62
    %78 = vmatprep.subr.mxu0 0.0
    %79 = vmatpush1.msra.mxu0 0.0
    %80 = vmatprep.subr.mxu0 0.0
    %81 = vmatpush1.msra.mxu0 0.0
    %82 = vmatprep.subr.mxu0 0.0
    %83 = vmatpush1.msra.mxu0 0.0
    %84 = vmatprep.subr.mxu0 0.0
    %85 = vmatpush1.msra.mxu0 0.0
    %86 = vmatprep.subr.mxu0 0.0
    %87 = vmatpush1.msra.mxu0 0.0
    %88 = vmatprep.subr.mxu0 0.0
    %89 = vmatpush1.msra.mxu0 0.0
    %90 = vmatprep.subr.mxu0 0.0
    %91 = vmatpush1.msra.mxu0 0.0
    %92 = vmatprep.subr.mxu0 0.0
    %93 = vmatpush1.msra.mxu0 0.0
    %94 = vmatprep.subr.mxu0 0.0
    %95 = vmatpush1.msra.mxu0 0.0
    %96 = vmatprep.subr.mxu0 0.0
    %97 = vmatpush1.msra.mxu0 0.0
    %98 = vmatprep.subr.mxu0 0.0
    %99 = vmatpush1.msra.mxu0 0.0
    %100 = vmatprep.subr.mxu0 0.0
    %101 = vmatpush1.msra.mxu0 0.0
    %102 = vmatprep.subr.mxu0 0.0
    %103 = vmatpush1.msra.mxu0 0.0
    %104 = vmatprep.subr.mxu0 0.0
    %105 = vmatpush1.msra.mxu0 0.0
    %106 = vmatprep.subr.mxu0 0.0
    %107 = vmatpush1.msra.mxu0 0.0
    %108 = vmatprep.subr.mxu0 0.0
    %109 = vmatpush1.msra.mxu0 0.0
    %110 = vmatprep.subr.mxu0 0.0
    %111 = vmatpush1.msra.mxu0 0.0
    %112 = vmatprep.subr.mxu0 0.0
    %113 = vmatpush1.msra.mxu0 0.0
    %114 = vmatprep.subr.mxu0 0.0
    %115 = vmatpush1.msra.mxu0 0.0
    %116 = vmatprep.subr.mxu0 0.0
    %117 = vmatpush1.msra.mxu0 0.0
    %118 = vmatprep.subr.mxu0 0.0
    %119 = vmatpush1.msra.mxu0 0.0
    %120 = vmatprep.subr.mxu0 0.0
    %121 = vmatpush1.msra.mxu0 0.0
    %122 = vmatprep.subr.mxu0 0.0
    %123 = vmatpush1.msra.mxu0 0.0
    %124 = vmatprep.subr.mxu0 0.0
    %125 = vmatpush1.msra.mxu0 0.0
    %126 = vmatprep.subr.mxu0 0.0
    %127 = vmatpush1.msra.mxu0 0.0
    %128 = vmatprep.subr.mxu0 0.0
    %129 = vmatpush1.msra.mxu0 0.0
    %130 = vmatprep.subr.mxu0 0.0
    %131 = vmatpush1.msra.mxu0 0.0
    %132 = vmatprep.subr.mxu0 0.0
    %133 = vmatpush1.msra.mxu0 0.0
    %134 = vmatprep.subr.mxu0 0.0
    %135 = vmatpush1.msra.mxu0 0.0
    %136 = vmatprep.subr.mxu0 0.0
    %137 = vmatpush1.msra.mxu0 0.0
    %138 = vmatprep.mubr.f32.mxu0 0.0
    %139 = vmatmul.mubr.f32.gmra.mrb[0].mxu0 %v72
    %v140 = vpop.f32.mrb[0].mxu0
    %v141 = vadd.f32 %v68, %v140
    %v142 = vpop.f32.mrb[0].mxu0
    %143 = vdwg.mxu0
    %v144 = vtanh.pop %v141
    %v145 = vld [vmem:[#allocation7] sm:$0xff]
    %v146 = vld [vmem:[#allocation7 + $0x8] sm:$0xff]
    %v147 = vld [vmem:[#allocation7 + $0x10] sm:$0xff]
    %v148 = vld [vmem:[#allocation7 + $0x18] sm:$0xff]
    %v149 = vld [vmem:[#allocation7 + $0x20] sm:$0xff]
    %v150 = vld [vmem:[#allocation7 + $0x28] sm:$0xff]
    %v151 = vld [vmem:[#allocation7 + $0x30] sm:$0xff]
    %v152 = vld [vmem:[#allocation7 + $0x38] sm:$0xff]
    %v153 = vld [vmem:[#allocation7 + $0x40] sm:$0xff]
    %v154 = vld [vmem:[#allocation7 + $0x48] sm:$0xff]
    %v155 = vld [vmem:[#allocation7 + $0x50] sm:$0xff]
    %v156 = vld [vmem:[#allocation7 + $0x58] sm:$0xff]
    %v157 = vld [vmem:[#allocation7 + $0x60] sm:$0xff]
    %v158 = vld [vmem:[#allocation7 + $0x68] sm:$0xff]
    %v159 = vld [vmem:[#allocation7 + $0x70] sm:$0xff]
    %v160 = vld [vmem:[#allocation7 + $0x78] sm:$0xff]
    %v161 = vld [vmem:[%s4] sm:$0x1]
    %v163 = vlaneseq
    %v164 = vshrl.u32 %v163, 7
    %v165 = vsub.s32 0, %v164
    %v166 = vrot.slane %v161, %v165
    %168 = vmatprep.subr.mxu0 0.0
    %169 = vmatpush1.msra.mxu0 %v145
    %170 = vmatprep.subr.mxu0 0.0
    %171 = vmatpush1.msra.mxu0 %v146
    %172 = vmatprep.subr.mxu0 0.0
    %173 = vmatpush1.msra.mxu0 %v147
    %174 = vmatprep.subr.mxu0 0.0
    %175 = vmatpush1.msra.mxu0 %v148
    %176 = vmatprep.subr.mxu0 0.0
    %177 = vmatpush1.msra.mxu0 %v149
    %178 = vmatprep.subr.mxu0 0.0
    %179 = vmatpush1.msra.mxu0 %v150
    %180 = vmatprep.subr.mxu0 0.0
    %181 = vmatpush1.msra.mxu0 %v151
    %182 = vmatprep.subr.mxu0 0.0
    %183 = vmatpush1.msra.mxu0 %v152
    %184 = vmatprep.subr.mxu0 0.0
    %185 = vmatpush1.msra.mxu0 %v153
    %186 = vmatprep.subr.mxu0 0.0
    %187 = vmatpush1.msra.mxu0 %v154
    %188 = vmatprep.subr.mxu0 0.0
    %189 = vmatpush1.msra.mxu0 %v155
    %190 = vmatprep.subr.mxu0 0.0
    %191 = vmatpush1.msra.mxu0 %v156
    %192 = vmatprep.subr.mxu0 0.0
    %193 = vmatpush1.msra.mxu0 %v157
    %194 = vmatprep.subr.mxu0 0.0
    %195 = vmatpush1.msra.mxu0 %v158
    %196 = vmatprep.subr.mxu0 0.0
    %197 = vmatpush1.msra.mxu0 %v159
    %198 = vmatprep.subr.mxu0 0.0
    %199 = vmatpush1.msra.mxu0 %v160
    %200 = vmatprep.subr.mxu0 0.0
    %201 = vmatpush1.msra.mxu0 0.0
    %202 = vmatprep.subr.mxu0 0.0
    %203 = vmatpush1.msra.mxu0 0.0
    %204 = vmatprep.subr.mxu0 0.0
    %205 = vmatpush1.msra.mxu0 0.0
    %206 = vmatprep.subr.mxu0 0.0
    %207 = vmatpush1.msra.mxu0 0.0
    %208 = vmatprep.subr.mxu0 0.0
    %209 = vmatpush1.msra.mxu0 0.0
    %210 = vmatprep.subr.mxu0 0.0
    %211 = vmatpush1.msra.mxu0 0.0
    %212 = vmatprep.subr.mxu0 0.0
    %213 = vmatpush1.msra.mxu0 0.0
    %214 = vmatprep.subr.mxu0 0.0
    %215 = vmatpush1.msra.mxu0 0.0
    %216 = vmatprep.subr.mxu0 0.0
    %217 = vmatpush1.msra.mxu0 0.0
    %218 = vmatprep.subr.mxu0 0.0
    %219 = vmatpush1.msra.mxu0 0.0
    %220 = vmatprep.subr.mxu0 0.0
    %221 = vmatpush1.msra.mxu0 0.0
    %222 = vmatprep.subr.mxu0 0.0
    %223 = vmatpush1.msra.mxu0 0.0
    %224 = vmatprep.subr.mxu0 0.0
    %225 = vmatpush1.msra.mxu0 0.0
    %226 = vmatprep.subr.mxu0 0.0
    %227 = vmatpush1.msra.mxu0 0.0
    %228 = vmatprep.subr.mxu0 0.0
    %229 = vmatpush1.msra.mxu0 0.0
    %230 = vmatprep.subr.mxu0 0.0
    %231 = vmatpush1.msra.mxu0 0.0
    %232 = vmatprep.mubr.f32.mxu0 0.0
    %233 = vmatmul.mubr.f32.gmra.mrb[0].mxu0 %v144
    %v234 = vpop.f32.mrb[0].mxu0
    %v235 = vadd.f32 %v166, %v234
    %v236 = vpop.f32.mrb[0].mxu0
    %237 = vdwg.mxu0
    %238 = vst [vmem:[#allocation8] sm:$0xff] %v235
    // Predicated region
    $region34: #{tpu_custom_call.1} parent=1 // pred_check
      _
    $region35: #{tpu_custom_call.1} parent=1 // pred_check_branch
      %240 = sbr.rel (0) target = $region37
    $region36: #{tpu_custom_call.1} parent=1 // pred_region
      %s242 = ssub.s32 128, 128
      %243 = vsyncadd [#allocation4], %s242
      %s245 = sshll.u32 [#allocation8], 4
      %s246 = int_to_ptr.vmem [resolvable:$true] %s245
      %248 = dma.vmem_to_hbm [thread:$0]  %s246, 128, %s5, [#allocation4]
    $region37: #{tpu_custom_call.1} parent=1 // pred_fallthru
      _
    // Predicated region
    $region38: #{tpu_custom_call.1} parent=1 // pred_check
      _
    $region39: #{tpu_custom_call.1} parent=1 // pred_check_branch
      %250 = sbr.rel (0) target = $region41
    $region40: #{tpu_custom_call.1} parent=1 // pred_region
      %251 = dma.done [#allocation4], 128
    $region41: #{tpu_custom_call.1} parent=1 // pred_fallthru
      _
    %252 = vsyncpa [#allocation3], 1
    %253 = vsyncpa [#allocation6], 1
    %254 = vsyncpa [#allocation4], 1

</llo_original>
